<compile_context>
chip_gen: v5e
topology: v5e:2x2
jax: 0.10.0
libtpu: 0.0.40
codegen_flags: <defaults>
</compile_context>

<pallas_src>
import math
import numpy as np
import jax
import jax.numpy as jnp
from jax.experimental import pallas as pl
from jax.experimental.pallas import tpu as pltpu


def _round_up(x, m):
    return ((x + m - 1) // m) * m


# ----------------------------------------------------------------------------
# Glue: RBF spectrum construction (mirrors construct_rbf_spectrum in PyTorch).
# ----------------------------------------------------------------------------
def construct_rbf_spectrum(N, periods, leng):
    periods = jnp.asarray(periods, dtype=jnp.float32)
    dim = periods.shape[0]
    leng = jnp.broadcast_to(jnp.asarray(leng, dtype=jnp.float32).reshape(-1), (dim,))

    # N_per_dimension = ceil(N^(1/dim)), bumped to the next odd integer
    n_per_dim = int(np.ceil(np.power(N, 1.0 / dim)))
    n_per_dim += 1 - n_per_dim % 2

    freqs_1d = np.arange(n_per_dim, dtype=np.float32) - np.floor(n_per_dim / 2)
    # cartesian product, first array varies slowest (sklearn `cartesian` order)
    grids = np.meshgrid(*([freqs_1d] * dim), indexing="ij")
    freqs = np.stack([g.reshape(-1) for g in grids], axis=-1).astype(np.float32)
    freqs = jnp.asarray(freqs)                           # [F, dim], F = n_per_dim^dim

    w0 = 2.0 * math.pi / periods                         # [dim]
    w = freqs * w0                                       # [F, dim]
    eig = jnp.exp(-0.5 * (w * leng) ** 2) * leng * w0 / 2.5066282746310002
    eigvals = jnp.prod(eig, axis=1)                      # [F]
    err = 1.0 - jnp.sum(eigvals)
    return w, eigvals, err


# ----------------------------------------------------------------------------
# Pallas kernel: out = cos(X @ wT - pi/4) * sqrt(eigvals)
#   The contraction over D (2-3) is done as VPU broadcast-FMAs; the -pi/4 phase
#   is folded into the accumulator init.  cos runs on the EUP.
# ----------------------------------------------------------------------------
def fsf_kernel(x_ref, wt_ref, se_ref, o_ref):
    # x_ref: [tb, D], wt_ref: [D, tf], se_ref: [1, tf], o_ref: [tb, tf]
    x = x_ref[...]
    wt = wt_ref[...]
    tb = x.shape[0]
    tf = wt.shape[1]
    acc = jnp.full((tb, tf), -math.pi / 4.0, dtype=jnp.float32)
    for d in range(x.shape[1]):                      # D is tiny -> static unroll
        acc = acc + x[:, d:d + 1] * wt[d:d + 1, :]   # outer-product FMA on the VPU
    o_ref[...] = (jnp.cos(acc) * se_ref[...]).astype(o_ref.dtype)


def fsf_forward(x, w, eigvals, *, tb=512, tf_max=2048, out_dtype=jnp.float32):
    """x: [B, dim] float32; w: [F, dim]; eigvals: [F] -> out [B, F]."""
    B, D = x.shape
    F = w.shape[0]
    x = x.astype(jnp.float32)
    wt = jnp.asarray(w, jnp.float32).T                   # [D, F]
    se = jnp.sqrt(jnp.asarray(eigvals, jnp.float32)).reshape(1, F)

    # ---- feature axis: lane-dense padding to a multiple of 128, tiled by tf ----
    F128 = _round_up(F, 128)
    if F128 <= tf_max:
        tf, Fp = F128, F128
    else:
        tf = tf_max                                      # multiple of 128
        Fp = _round_up(F, tf)
    if Fp != F:
        # Zero-padded eigvals columns produce exact zeros -> slice is exact.
        wt = jnp.pad(wt, ((0, 0), (0, Fp - F)))
        se = jnp.pad(se, ((0, 0), (0, Fp - F)))

    # ---- batch axis: tile multiple of 8, pad B to a multiple of tb ----
    tb = _round_up(max(8, min(tb, _round_up(B, 8))), 8)
    Bp = _round_up(B, tb)
    xp = jnp.pad(x, ((0, Bp - B), (0, 0))) if Bp != B else x

    grid = (Bp // tb, Fp // tf)
    out = pl.pallas_call(
        fsf_kernel,
        out_shape=jax.ShapeDtypeStruct((Bp, Fp), out_dtype),
        grid=grid,
        in_specs=[
            pl.BlockSpec((tb, D), lambda i, j: (i, 0)),  # X tile over batch
            pl.BlockSpec((D, tf), lambda i, j: (0, j)),  # wT: reused across batch tiles
            pl.BlockSpec((1, tf), lambda i, j: (0, j)),  # sqrt(eigvals): reused too
        ],
        out_specs=pl.BlockSpec((tb, tf), lambda i, j: (i, j)),
        compiler_params=pltpu.CompilerParams(
            dimension_semantics=("parallel", "parallel"),
            vmem_limit_bytes=64 * 1024 * 1024,
        ),
    )(xp, wt, se)

    if Bp != B or Fp != F:
        out = out[:B, :F]
    return out


# ----------------------------------------------------------------------------
# FSF module equivalent (deterministic parameter init, no checkpoint).
# ----------------------------------------------------------------------------
class FSF:
    def __init__(self, dim, nfeatures, periods, leng=1.0):
        self.dim = dim
        self.nfeatures = nfeatures
        self.logleng = jnp.asarray(np.log(leng), dtype=jnp.float32)  # scalar param
        self.periods = jnp.asarray(periods, dtype=jnp.float32)       # [dim]

    def __call__(self, X):
        leng = jnp.exp(self.logleng)
        w, eigvals, _ = construct_rbf_spectrum(self.nfeatures, self.periods, leng)
        return fsf_forward(X, w, eigvals)


if __name__ == "__main__":
    dim = 2
    nfeatures = 64          # -> n_per_dim = 9 (odd), F = 81 spectrum features
    periods = [4.0, 3.0]
    batch = 8

    key = jax.random.PRNGKey(0)
    X = jax.random.normal(key, (batch, dim), dtype=jnp.float32)

    model = FSF(dim, nfeatures, periods, leng=1.0)
    out = model(X)
    out = jax.block_until_ready(out)

    # Pure-JAX reference check of the same math.
    w_ref, eig_ref, _ = construct_rbf_spectrum(
        nfeatures, jnp.asarray(periods, jnp.float32), jnp.exp(model.logleng))
    ref = jnp.cos(X @ w_ref.T - math.pi / 4.0) * jnp.sqrt(eig_ref)
    np.testing.assert_allclose(np.asarray(out), np.asarray(ref), rtol=1e-5, atol=1e-5)

    print("KERNEL_OK")
</pallas_src>

<mosaic_0001>
module attributes {stable_mosaic.version = 11 : i64} {
  func.func @fsf_kernel(%arg0: i32, %arg1: i32, %arg2: memref<8x2xf32, #tpu.memory_space<vmem>>, %arg3: memref<2x128xf32, #tpu.memory_space<vmem>>, %arg4: memref<1x128xf32, #tpu.memory_space<vmem>>, %arg5: memref<8x128xf32, #tpu.memory_space<vmem>>) attributes {dimension_semantics = [#tpu.dimension_semantics<parallel>, #tpu.dimension_semantics<parallel>], iteration_bounds = array<i64: 1, 1>, scalar_prefetch = 0 : i64, scratch_operands = 0 : i64, tpu.core_type = #tpu.core_type<tc>, window_params = [{transform_indices = @transform_0, window_bounds = array<i64: 8, 2>}, {transform_indices = @transform_1, window_bounds = array<i64: 2, 128>}, {transform_indices = @transform_2, window_bounds = array<i64: 1, 128>}, {transform_indices = @transform_3, window_bounds = array<i64: 8, 128>}]} {
    %c0 = arith.constant 0 : index
    %c0_0 = arith.constant 0 : index
    %0 = vector.load %arg2[%c0, %c0_0] : memref<8x2xf32, #tpu.memory_space<vmem>>, vector<8x2xf32>
    %c0_1 = arith.constant 0 : index
    %c0_2 = arith.constant 0 : index
    %1 = vector.load %arg3[%c0_1, %c0_2] : memref<2x128xf32, #tpu.memory_space<vmem>>, vector<2x128xf32>
    %cst = arith.constant -0.785398185 : f32
    %2 = vector.broadcast %cst : f32 to vector<8x128xf32>
    %3 = vector.extract_strided_slice %0 {offsets = [0, 0], sizes = [8, 1], strides = [1, 1]} : vector<8x2xf32> to vector<8x1xf32>
    %4 = vector.extract_strided_slice %1 {offsets = [0, 0], sizes = [1, 128], strides = [1, 1]} : vector<2x128xf32> to vector<1x128xf32>
    %5 = vector.broadcast %3 : vector<8x1xf32> to vector<8x128xf32>
    %6 = vector.broadcast %4 : vector<1x128xf32> to vector<8x128xf32>
    %7 = arith.mulf %5, %6 : vector<8x128xf32>
    %8 = arith.addf %2, %7 : vector<8x128xf32>
    %9 = vector.extract_strided_slice %0 {offsets = [0, 1], sizes = [8, 1], strides = [1, 1]} : vector<8x2xf32> to vector<8x1xf32>
    %10 = vector.extract_strided_slice %1 {offsets = [1, 0], sizes = [1, 128], strides = [1, 1]} : vector<2x128xf32> to vector<1x128xf32>
    %11 = vector.broadcast %9 : vector<8x1xf32> to vector<8x128xf32>
    %12 = vector.broadcast %10 : vector<1x128xf32> to vector<8x128xf32>
    %13 = arith.mulf %11, %12 : vector<8x128xf32>
    %14 = arith.addf %8, %13 : vector<8x128xf32>
    %15 = math.cos %14 : vector<8x128xf32>
    %c0_3 = arith.constant 0 : index
    %c0_4 = arith.constant 0 : index
    %16 = vector.load %arg4[%c0_3, %c0_4] : memref<1x128xf32, #tpu.memory_space<vmem>>, vector<1x128xf32>
    %17 = vector.broadcast %16 : vector<1x128xf32> to vector<8x128xf32>
    %18 = arith.mulf %15, %17 : vector<8x128xf32>
    %c0_5 = arith.constant 0 : index
    %c0_6 = arith.constant 0 : index
    %19 = vector.load %arg5[%c0_5, %c0_6] : memref<8x128xf32, #tpu.memory_space<vmem>>, vector<8x128xf32>
    tpu.vector_store %arg5[%c0_5, %c0_6], %18 {strides = array<i32>} : memref<8x128xf32, #tpu.memory_space<vmem>>, vector<8x128xf32>,
    return
  }
  func.func @transform_0(%arg0: i32, %arg1: i32) -> (i32, i32) {
    %c0_i32 = arith.constant 0 : i32
    %c0_i32_0 = arith.constant 0 : i32
    return %arg0, %c0_i32 : i32, i32
  }
  func.func @transform_1(%arg0: i32, %arg1: i32) -> (i32, i32) {
    %c0_i32 = arith.constant 0 : i32
    %c0_i32_0 = arith.constant 0 : i32
    return %c0_i32, %arg1 : i32, i32
  }
  func.func @transform_2(%arg0: i32, %arg1: i32) -> (i32, i32) {
    %c0_i32 = arith.constant 0 : i32
    %c0_i32_0 = arith.constant 0 : i32
    return %c0_i32, %arg1 : i32, i32
  }
  func.func @transform_3(%arg0: i32, %arg1: i32) -> (i32, i32) {
    %c0_i32 = arith.constant 0 : i32
    return %arg0, %arg1 : i32, i32
  }
}

</mosaic_0001>

<llo_original>
// kernel: tpu_custom_call.1
$region0: #{tpu_custom_call.1}
  #allocation0 [shape = 'u32[]', space=smem, size = 0x4, offset = 0x4, fixed_abs, tag = 'smem constant byte address 0x4 - core index']
  #allocation1 [shape = 'u32[72,128]{1,0:T(1,128)}', space=vmem, size = 0x9000, scoped, tag = 'internal scratch']
  %s0 = inlined_call_operand.vmem [shape: f32[8,2], index: 0, kind: input, shape index: {}]
  %s1 = inlined_call_operand.vmem [shape: f32[2,128], index: 1, kind: input, shape index: {}]
  %s2 = inlined_call_operand.vmem [shape: f32[1,128], index: 2, kind: input, shape index: {}]
  %s3 = inlined_call_operand.hbm [shape: f32[8,128], index: 3, kind: output, shape index: {}]
  %s4 = sld [smem:[#allocation0]]
  $region22: #{tpu_custom_call.1} parent=0
    _
  %s6 = ssub.s32 1, %s4
  %s7 = scalar_select 0, %s6, %s4
  $region1: #{tpu_custom_call.1} parent=0
    #allocation2 [shape = 'u8[4096]{0}', space=vmem, size = 0x1000, scoped, tag = 'output window, operand 0, single buffered']
    #allocation3 [shape = 's32[1]{0}', space=sflag, size = 0x4, scoped, tag = 'scoped memory for tpu_custom_call.1']
    %8 = vsyncpa [#allocation3], 0
    // Predicated region
    $region2: #{tpu_custom_call.1} parent=1 // pred_check
      _
    $region3: #{tpu_custom_call.1} parent=1 // pred_check_branch
      %10 = sbr.rel (0) target = $region5
    $region4: #{tpu_custom_call.1} parent=1 // pred_region
      _
    $region5: #{tpu_custom_call.1} parent=1 // pred_fallthru
      _
    // Predicated region
    $region6: #{tpu_custom_call.1} parent=1 // pred_check
      _
    $region7: #{tpu_custom_call.1} parent=1 // pred_check_branch
      %12 = sbr.rel (0) target = $region9
    $region8: #{tpu_custom_call.1} parent=1 // pred_region
      _
    $region9: #{tpu_custom_call.1} parent=1 // pred_fallthru
      _
    // Predicated region
    $region10: #{tpu_custom_call.1} parent=1 // pred_check
      _
    $region11: #{tpu_custom_call.1} parent=1 // pred_check_branch
      %14 = sbr.rel (0) target = $region13
    $region12: #{tpu_custom_call.1} parent=1 // pred_region
      _
    $region13: #{tpu_custom_call.1} parent=1 // pred_fallthru
      _
    %v15 = vld [vmem:[%s0] sm:$0xff]
    %v16 = vld [vmem:[%s1] sm:$0x3]
    %18 = vset.pattern.permute.xlu0 0
    %19 = vperm.xlu0 %18, %v15
    %v20 = vpop.permute.xlu0 %19
    %v22 = vperm.slane %v16, 0
    %v23 = vmul.f32 %v20, %v22
    %v24 = vadd.f32 %v23, -0.7853982
    %25 = vset.pattern.permute.xlu0 1
    %26 = vperm.xlu0 %25, %v15
    %v27 = vpop.permute.xlu0 %26
    %v29 = vperm.slane %v16, 1
    %v30 = vmul.f32 %v27, %v29
    %v31 = vadd.f32 %v24, %v30
    %v32 = vand.u32 2147483647, %v31
    %vm33 = vcmp.le.f32.partialorder %v32, 0.7853982
    %vm34 = vcmp.lt.s32.totalorder %v31, 0
    %v35 = vand.u32 %v31, 2139095040
    %v36 = vshrl.u32 %v35, 23
    %v37 = vsub.s32 %v36, 127
    %v38 = vand.u32 2147483647, %v31
    %v39 = vand.u32 %v38, 8388607
    %v40 = vor.u32 %v39, 8388608
    %v41 = vsub.s32 0, %v40
    %v42 = vadd.s32 %v37, 1
    %vm43 = vcmp.gt.s32.totalorder %v42, 0
    %v44 = vsel %vm43, %v42, 0
    %v45 = vshrl.u32 %v44, 5
    %v46 = vand.u32 %v44, 31
    %v47 = vsub.s32 32, %v46
    %v48 = vshrl.u32 683565275, %v47
    %v49 = vshll.u32 683565275, %v46
    %v50 = vshrl.u32 2475754826, %v47
    %v51 = vor.u32 %v49, %v50
    %v52 = vshll.u32 2475754826, %v46
    %v53 = vshrl.u32 2131351028, %v47
    %v54 = vor.u32 %v52, %v53
    %v55 = vshll.u32 2131351028, %v46
    %v56 = vshrl.u32 2102212464, %v47
    %v57 = vor.u32 %v55, %v56
    %v58 = vshll.u32 2102212464, %v46
    %v59 = vshrl.u32 920167782, %v47
    %v60 = vor.u32 %v58, %v59
    %v61 = vshll.u32 920167782, %v46
    %v62 = vshrl.u32 1326507024, %v47
    %v63 = vor.u32 %v61, %v62
    %vm64 = vcmp.lt.s32.totalorder %v45, 1
    %vm65 = vcmp.lt.s32.totalorder %v45, 2
    %vm66 = vcmp.lt.s32.totalorder %v45, 3
    %vm67 = vcmp.lt.s32.totalorder %v45, 4
    %v68 = vsel %vm64, %v48, %v51
    %v69 = vsel %vm67, %v57, 2102212464
    %v70 = vsel %vm66, %v54, %v69
    %v71 = vsel %vm65, %v68, %v70
    %v72 = vsel %vm64, %v51, %v54
    %v73 = vsel %vm67, %v60, 920167782
    %v74 = vsel %vm66, %v57, %v73
    %v75 = vsel %vm65, %v72, %v74
    %v76 = vsel %vm64, %v54, %v57
    %v77 = vsel %vm67, %v63, 1326507024
    %v78 = vsel %vm66, %v60, %v77
    %v79 = vsel %vm65, %v76, %v78
    %v80 = vshll.u32 %v40, 8
    %v81 = vand.u32 %v80, 65535
    %v82 = vshrl.u32 %v80, 16
    %v83 = vand.u32 %v79, 65535
    %v84 = vshrl.u32 %v79, 16
    %v85 = vmul.u32 %v81, %v83
    %v86 = vmul.u32 %v81, %v84
    %v87 = vmul.u32 %v82, %v83
    %v88 = vmul.u32 %v82, %v84
    %v89 = vshll.u32 %v86, 16
    %v90 = vshrl.u32 %v86, 16
    %v91 = vshll.u32 %v87, 16
    %v92 = vshrl.u32 %v87, 16
    %vm93 = vc.u32 %v85, %v89
    %v94 = vsel %vm93, 1, 0
    %v95 = vadd.s32 %v85, %v89
    %v96 = vadd.s32 %v88, %v94
    %vm97 = vc.u32 %v95, %v91
    %v98 = vsel %vm97, 1, 0
    %v99 = vadd.s32 %v95, %v91
    %v100 = vadd.s32 %v96, %v98
    %v101 = vadd.s32 %v100, %v90
    %v102 = vadd.s32 %v101, %v92
    %v103 = vand.u32 %v80, 65535
    %v104 = vshrl.u32 %v80, 16
    %v105 = vand.u32 %v75, 65535
    %v106 = vshrl.u32 %v75, 16
    %v107 = vmul.u32 %v103, %v105
    %v108 = vmul.u32 %v103, %v106
    %v109 = vmul.u32 %v104, %v105
    %v110 = vmul.u32 %v104, %v106
    %v111 = vshll.u32 %v108, 16
    %v112 = vshrl.u32 %v108, 16
    %v113 = vshll.u32 %v109, 16
    %v114 = vshrl.u32 %v109, 16
    %vm115 = vc.u32 %v107, %v111
    %v116 = vsel %vm115, 1, 0
    %v117 = vadd.s32 %v107, %v111
    %v118 = vadd.s32 %v110, %v116
    %vm119 = vc.u32 %v117, %v113
    %v120 = vsel %vm119, 1, 0
    %v121 = vadd.s32 %v117, %v113
    %v122 = vadd.s32 %v118, %v120
    %v123 = vadd.s32 %v122, %v112
    %v124 = vadd.s32 %v123, %v114
    %v125 = vmul.u32 %v80, %v71
    %v126 = vadd.s32 %v102, %v121
    %vm127 = vc.u32 %v102, %v121
    %v128 = vadd.s32 %v124, 1
    %v129 = vsel %vm127, %v128, %v124
    %v130 = vadd.s32 %v125, %v129
    %v131 = vadd.s32 %v130, 536870912
    %v132 = vshrl.u32 %v131, 30
    %v133 = vshll.u32 %v132, 30
    %v134 = vsub.s32 %v130, %v133
    %vm135 = vcmp.lt.s32.totalorder %v134, 0
    %v136 = vsub.s32 0, %v134
    %v137 = vsel %vm135, %v136, %v134
    %v138 = vclz %v137
    %v139 = vsub.s32 %v138, 2
    %vm140 = vcmp.gt.s32.totalorder 0, %v139
    %v141 = vsel %vm140, 0, %v139
    %v142 = vsub.s32 32, %v141
    %v143 = vshll.u32 %v134, %v141
    %v144 = vshrl.u32 %v126, %v142
    %v145 = vor.u32 %v143, %v144
    %v146 = vsub.s32 4294967266, %v141
    %v147 = vadd.s32 %v146, 127
    %v148 = vshll.u32 %v147, 23
    %v149 = vor.u32 4788187, %v148
    %v150 = vand.u32 2147483647, %v149
    %v152 = vcvt.s32.f32 %v145
    %v153 = vmul.f32 %v152, %v150
    %v154 = vxor.u32 %v153, 2147483648
    %v155 = vsel %vm34, %v154, %v153
    %v156 = vsub.s32 4, %v132
    %v157 = vsel %vm34, %v156, %v132
    %v158 = vsel %vm33, %v31, %v155
    %v159 = vsel %vm33, 0, %v157
    %v160 = vmul.f32 %v158, %v158
    %v161 = vmul.f32 %v160, -0.001358992
    %v162 = vadd.f32 %v161, 0.041655596
    %v163 = vmul.f32 %v160, %v162
    %v164 = vadd.f32 %v163, -0.4999988
    %v165 = vmul.f32 %v160, %v164
    %v166 = vadd.f32 1.0, %v165
    %v167 = vmul.f32 %v158, %v158
    %v168 = vmul.f32 %v167, -0.00019511016
    %v169 = vadd.f32 %v168, 0.008332121
    %v170 = vmul.f32 %v167, %v169
    %v171 = vadd.f32 %v170, -0.16666654
    %v172 = vmul.f32 %v167, %v171
    %v173 = vadd.f32 %v172, 1.0
    %v174 = vmul.f32 %v173, %v158
    %vm175 = vweird.f32 %v31
    %v176 = vand.u32 %v159, 3
    %vm177 = vcmp.lt.s32.totalorder %v176, 2
    %vm178 = vcmp.eq.s32.totalorder %v176, 0
    %v179 = vxor.u32 %v174, 2147483648
    %v180 = vsel %vm178, %v166, %v179
    %vm181 = vcmp.eq.s32.totalorder %v176, 2
    %v182 = vxor.u32 %v166, 2147483648
    %v183 = vsel %vm181, %v182, %v174
    %v184 = vsel %vm177, %v180, %v183
    %v185 = vsel %vm175, nan, %v184
    %v186 = vld [vmem:[%s2] sm:$0x1]
    %v188 = vperm.slane %v186, 0
    %v190 = vmul.f32 %v185, %v188
    %191 = vst [vmem:[#allocation2] sm:$0xff] %v190
    // Predicated region
    $region14: #{tpu_custom_call.1} parent=1 // pred_check
      _
    $region15: #{tpu_custom_call.1} parent=1 // pred_check_branch
      %193 = sbr.rel (0) target = $region17
    $region16: #{tpu_custom_call.1} parent=1 // pred_region
      %195 = vsyncadd [#allocation3], 0
      %s197 = sshll.u32 [#allocation2], 4
      %s198 = int_to_ptr.vmem [resolvable:$true] %s197
      %s199 = sshll.u32 %s3, 4
      %s200 = int_to_ptr.hbm [resolvable:$true] %s199
      %202 = dma.vmem_to_hbm [thread:$0]  %s198, 128, %s200, [#allocation3]
    $region17: #{tpu_custom_call.1} parent=1 // pred_fallthru
      _
    // Predicated region
    $region18: #{tpu_custom_call.1} parent=1 // pred_check
      _
    $region19: #{tpu_custom_call.1} parent=1 // pred_check_branch
      %204 = sbr.rel (0) target = $region21
    $region20: #{tpu_custom_call.1} parent=1 // pred_region
      %206 = dma.done [#allocation3], 128
    $region21: #{tpu_custom_call.1} parent=1 // pred_fallthru
      _
    %207 = vsyncpa [#allocation3], 1

</llo_original>
